<compile_context>
chip_gen: v7x
topology: tpu7x:2x2x1
jax: 0.10.0
libtpu: 0.0.40
codegen_flags: <defaults>
</compile_context>

<pallas_src>
import functools

import jax
import jax.numpy as jnp
from jax.experimental import pallas as pl
from jax.experimental.pallas import tpu as pltpu


# ----------------------------- helpers ---------------------------------------

def _round_up(x, m):
    return (x + m - 1) // m * m


# ------------------------ fused GEMM Pallas kernel ----------------------------

def _gemm_kernel(*refs, act, res_mode, has_blend):
    """out = blend( res( act( (A@B)*scale + shift ) ) ) -- epilogues fused."""
    a_ref, b_ref, s_ref, t_ref = refs[:4]
    i = 4
    res_ref = None
    if res_mode != "none":
        res_ref = refs[i]
        i += 1
    if has_blend:
        alpha_ref, other_ref = refs[i], refs[i + 1]
        i += 2
    o_ref = refs[i]

    acc = jnp.dot(a_ref[...], b_ref[...], preferred_element_type=jnp.float32)
    y = acc * s_ref[...] + t_ref[...]
    if act == "relu":
        y = jnp.maximum(y, 0.0)
    if res_mode == "add":
        y = y + res_ref[...]
    elif res_mode == "add_relu":
        y = jnp.maximum(y + res_ref[...], 0.0)
    if has_blend:
        alpha = jax.nn.sigmoid(alpha_ref[...])        # [tm,1], broadcast over lanes
        y = alpha * y + (1.0 - alpha) * other_ref[...]
    o_ref[...] = y.astype(o_ref.dtype)


def matmul_affine(a, b, scale, shift, *, act="none", residual=None,
                  res_mode="none", blend=None):
    """Fused (a @ b)*scale + shift on the MXU with bf16 operands / f32 accumulation.

    a: [M,K], b: [K,N] (N zero-padded to a multiple of 128), scale/shift: [N].
    residual: [M,N] used as res_mode "add" | "add_relu" (after the activation).
    blend: (alpha_logit [M,1], other [M,N]) -> out = sig(a)*y + (1-sig(a))*other.
    """
    assert (residual is None) == (res_mode == "none")
    M, K = a.shape
    Kb, N = b.shape
    assert K == Kb
    Np = _round_up(N, 128)
    padN = Np - N

    a16 = a.astype(jnp.bfloat16)
    b16 = b.astype(jnp.bfloat16)
    s = scale.astype(jnp.float32)
    t = shift.astype(jnp.float32)
    if padN:
        b16 = jnp.pad(b16, ((0, 0), (0, padN)))
        s = jnp.pad(s, (0, padN))
        t = jnp.pad(t, (0, padN))
    s = s.reshape(1, Np)
    t = t.reshape(1, Np)

    # lane tile (always a multiple of 128 -> unmasked full-lane stores)
    if Np <= 512:
        tn = Np
    elif Np % 512 == 0:
        tn = 512
    elif Np % 256 == 0:
        tn = 256
    else:
        tn = 128

    # row tile against a ~22 MiB double-buffered VMEM budget (v7x has 64 MiB total)
    n_big = (1 if residual is not None else 0) + (1 if blend is not None else 0)

    def vmem_bytes(tm_):
        return 2 * (tm_ * K * 2 + K * tn * 2 + 2 * tn * 4
                    + (1 + n_big) * tm_ * tn * 4
                    + (tm_ * 4 if blend is not None else 0))

    tm = 512
    while tm > 8 and vmem_bytes(tm) > 22 * 1024 * 1024:
        tm //= 2
    tm = max(8, min(tm, _round_up(M, 8)))

    grid = (pl.cdiv(M, tm), Np // tn)

    in_specs = [
        pl.BlockSpec((tm, K), lambda i, j: (i, 0)),
        pl.BlockSpec((K, tn), lambda i, j: (0, j)),
        pl.BlockSpec((1, tn), lambda i, j: (0, j)),
        pl.BlockSpec((1, tn), lambda i, j: (0, j)),
    ]
    args = [a16, b16, s, t]
    if residual is not None:
        r = residual.astype(jnp.float32)
        if padN:
            r = jnp.pad(r, ((0, 0), (0, padN)))
        in_specs.append(pl.BlockSpec((tm, tn), lambda i, j: (i, j)))
        args.append(r)
    if blend is not None:
        alpha, other = blend
        alpha = alpha.astype(jnp.float32).reshape(M, 1)
        other = other.astype(jnp.float32)
        if padN:
            other = jnp.pad(other, ((0, 0), (0, padN)))
        in_specs.append(pl.BlockSpec((tm, 1), lambda i, j: (i, 0)))
        in_specs.append(pl.BlockSpec((tm, tn), lambda i, j: (i, j)))
        args += [alpha, other]

    out = pl.pallas_call(
        functools.partial(_gemm_kernel, act=act, res_mode=res_mode,
                          has_blend=blend is not None),
        out_shape=jax.ShapeDtypeStruct((M, Np), jnp.float32),
        grid=grid,
        in_specs=in_specs,
        out_specs=pl.BlockSpec((tm, tn), lambda i, j: (i, j)),
        compiler_params=pltpu.CompilerParams(
            dimension_semantics=("parallel", "parallel"),
            vmem_limit_bytes=32 * 1024 * 1024),
    )(*args)
    if padN:
        out = out[:, :N]
    return out


# ------------------------- tiled elementwise add ------------------------------

def _add_kernel(a_ref, b_ref, o_ref):
    o_ref[...] = a_ref[...] + b_ref[...]


def pallas_add(a, b):
    """Tiled lane-dense elementwise add (same-shape arrays)."""
    shp = a.shape
    T = a.size
    cols = shp[-1]
    for cand in (1024, 512, 256, 128):
        if T % cand == 0:
            cols = cand
            break
    rows = T // cols
    a2 = a.reshape(rows, cols).astype(jnp.float32)
    b2 = b.reshape(rows, cols).astype(jnp.float32)
    row_cap = max(8, (4 * 1024 * 1024) // (cols * 4))
    tr = rows if rows <= row_cap else (row_cap // 8) * 8
    out = pl.pallas_call(
        _add_kernel,
        out_shape=jax.ShapeDtypeStruct((rows, cols), jnp.float32),
        grid=(pl.cdiv(rows, tr),),
        in_specs=[pl.BlockSpec((tr, cols), lambda i: (i, 0)),
                  pl.BlockSpec((tr, cols), lambda i: (i, 0))],
        out_specs=pl.BlockSpec((tr, cols), lambda i: (i, 0)),
        compiler_params=pltpu.CompilerParams(
            dimension_semantics=("parallel",),
            vmem_limit_bytes=32 * 1024 * 1024),
    )(a2, b2)
    return out.reshape(shp)


# ----------------------------- conv plumbing (glue) ---------------------------

def _affine_params(cout, bias=None, bn=None):
    scale = jnp.ones((cout,), jnp.float32)
    shift = jnp.zeros((cout,), jnp.float32) if bias is None else bias.astype(jnp.float32)
    if bn is not None:  # eval-mode BatchNorm folded into the GEMM epilogue
        gamma, beta, mean, var, eps = bn
        s = gamma / jnp.sqrt(var + eps)
        shift = (shift - mean) * s + beta
        scale = scale * s
    return scale, shift


def _im2col_nhwc(x, K, stride, padding, dilation):
    # TODO(synk): the 7x7 conv expands HBM traffic ~49x here; an implicit-GEMM Pallas
    # kernel building taps from a VMEM-resident tile would avoid the materialization.
    B, H, W, C = x.shape
    Ho = (H + 2 * padding - dilation * (K - 1) - 1) // stride + 1
    Wo = (W + 2 * padding - dilation * (K - 1) - 1) // stride + 1
    xp = jnp.pad(x.astype(jnp.bfloat16),
                 ((0, 0), (padding, padding), (padding, padding), (0, 0)))
    taps = []
    for ki in range(K):
        for kj in range(K):
            taps.append(
                xp[:, ki * dilation: ki * dilation + (Ho - 1) * stride + 1: stride,
                      kj * dilation: kj * dilation + (Wo - 1) * stride + 1: stride, :])
    cols = jnp.stack(taps, axis=3)                        # [B,Ho,Wo,K*K,C] (bf16)
    return cols.reshape(B * Ho * Wo, K * K * C), B, Ho, Wo


def _w_matrix(w):
    # [Cout, Cin, Kh, Kw] (PyTorch) -> [Kh*Kw*Cin, Cout] matching im2col tap order
    cout = w.shape[0]
    return jnp.transpose(w, (2, 3, 1, 0)).reshape(-1, cout)


def conv2d(x, w, bias=None, *, stride=1, padding=0, dilation=1, bn=None, act="none",
           residual=None, res_mode="none", blend=None):
    """NHWC conv = im2col + fused Pallas GEMM (bias/BN/act/residual/blend fused)."""
    Cout = w.shape[0]
    K = w.shape[2]
    cols, B, Ho, Wo = _im2col_nhwc(x, K, stride, padding, dilation)
    scale, shift = _affine_params(Cout, bias, bn)
    res_m = None if residual is None else residual.reshape(-1, Cout)
    blend_m = None
    if blend is not None:
        blend_m = (blend[0].reshape(-1, 1), blend[1].reshape(-1, Cout))
    out = matmul_affine(cols, _w_matrix(w), scale, shift, act=act,
                        residual=res_m, res_mode=res_mode, blend=blend_m)
    return out.reshape(B, Ho, Wo, Cout)


def conv_transpose2d(x, w_t, *, stride, padding, bn=None, act="none"):
    # PyTorch ConvTranspose2d weight layout: [Cin, Cout, K, K]; bias=False here.
    Cin, Cout, K, _ = w_t.shape
    B, H, W, C = x.shape
    xd = jnp.zeros((B, (H - 1) * stride + 1, (W - 1) * stride + 1, C), x.dtype)
    xd = xd.at[:, ::stride, ::stride, :].set(x)
    w_conv = jnp.flip(w_t, axis=(2, 3)).transpose(1, 0, 2, 3)    # [Cout, Cin, K, K]
    return conv2d(xd, w_conv, None, stride=1, padding=K - 1 - padding, bn=bn, act=act)


def upsample2x_bilinear(x):
    # nn.Upsample(scale_factor=2, mode='bilinear', align_corners=False)
    # TODO(synk): bilinear resize kept in plain JAX (no clean Pallas equivalent).
    B, H, W, C = x.shape
    return jax.image.resize(x, (B, 2 * H, 2 * W, C), method="bilinear")


# ------------------------- modulated deformable conv --------------------------

def dcn_v2(x, offset, mask, w, bias, *, stride, padding, dilation=1, bn=None,
           act="none", residual=None, res_mode="none", blend=None):
    """Modulated deformable conv (DCNv2), NHWC.

    offset: [B,Ho,Wo,2*KK] with the DCNv2 concat-then-interleave channel convention
    (channel 2k -> dy of tap k, 2k+1 -> dx).  mask: [B,Ho,Wo,KK], already sigmoided.
    TODO(synk): the data-dependent bilinear gather (deformable im2col) has no clean
    Pallas equivalent; it stays in plain JAX and only the GEMM runs in Pallas.
    """
    B, H, W, C = x.shape
    Cout, Cin, K, _ = w.shape
    Ho = (H + 2 * padding - dilation * (K - 1) - 1) // stride + 1
    Wo = (W + 2 * padding - dilation * (K - 1) - 1) // stride + 1
    KK = K * K

    ki = (jnp.arange(KK) // K).astype(jnp.float32)
    kj = (jnp.arange(KK) % K).astype(jnp.float32)
    ho = jnp.arange(Ho, dtype=jnp.float32)
    wo = jnp.arange(Wo, dtype=jnp.float32)
    base_y = ho[:, None, None] * stride - padding + ki[None, None, :] * dilation
    base_x = wo[None, :, None] * stride - padding + kj[None, None, :] * dilation
    off = offset.reshape(B, Ho, Wo, KK, 2)
    py = base_y[None, :, :, :] + off[..., 0]            # [B,Ho,Wo,KK]
    px = base_x[None, :, :, :] + off[..., 1]

    x16 = x.astype(jnp.bfloat16)
    x_flat = x16.reshape(B, H * W, C)

    def gather(yi, xi):
        valid = (yi >= 0) & (yi < H) & (xi >= 0) & (xi < W)
        yc = jnp.clip(yi, 0, H - 1).astype(jnp.int32)
        xc = jnp.clip(xi, 0, W - 1).astype(jnp.int32)
        idx = (yc * W + xc).reshape(B, Ho * Wo * KK, 1)
        idx = jnp.broadcast_to(idx, (B, Ho * Wo * KK, C))
        g = jnp.take_along_axis(x_flat, idx, axis=1).reshape(B, Ho, Wo, KK, C)
        return g * valid[..., None].astype(jnp.bfloat16)

    y0 = jnp.floor(py)
    x0 = jnp.floor(px)
    wy1 = py - y0
    wy0 = 1.0 - wy1
    wx1 = px - x0
    wx0 = 1.0 - wx1
    # TODO(synk): the four corner gathers still materialize [B,Ho,Wo,KK,C] tensors;
    # a manual-DMA Pallas gather kernel could fuse the weighted sum in VMEM.
    samp = (gather(y0, x0) * (wy0 * wx0)[..., None]
            + gather(y0, x0 + 1.0) * (wy0 * wx1)[..., None]
            + gather(y0 + 1.0, x0) * (wy1 * wx0)[..., None]
            + gather(y0 + 1.0, x0 + 1.0) * (wy1 * wx1)[..., None])
    samp = samp * mask[..., None]                        # modulation
    cols = samp.astype(jnp.bfloat16).reshape(B * Ho * Wo, KK * C)

    scale, shift = _affine_params(Cout, bias, bn)
    res_m = None if residual is None else residual.reshape(-1, Cout)
    blend_m = None
    if blend is not None:
        blend_m = (blend[0].reshape(-1, 1), blend[1].reshape(-1, Cout))
    out = matmul_affine(cols, _w_matrix(w), scale, shift, act=act,
                        residual=res_m, res_mode=res_mode, blend=blend_m)
    return out.reshape(B, Ho, Wo, Cout)


def dcn_layer(x, p, *, stride, padding, dilation=1, bn=None, act="none",
              residual=None, res_mode="none"):
    # DCN = conv_offset_mask (regular conv) + modulated deformable conv (DCNv2)
    K = p["w"].shape[2]
    KK = K * K
    om = conv2d(x, p["off_w"], p["off_b"], stride=stride, padding=padding,
                dilation=dilation)
    o1, o2, m = om[..., :KK], om[..., KK:2 * KK], om[..., 2 * KK:]
    offset = jnp.concatenate([o1, o2], axis=-1)
    mask = jax.nn.sigmoid(m)
    return dcn_v2(x, offset, mask, p["w"], p["b"], stride=stride, padding=padding,
                  dilation=dilation, bn=bn, act=act,
                  residual=residual, res_mode=res_mode)


# ------------------------------- FusionModule ---------------------------------

def _fusion_recur(f, i, fp):
    if i == fp["n_level"]:
        return f
    down = fp["down"][i]
    up = fp["up"][i]
    f_down = dcn_layer(f, down["dcn"], stride=2, padding=1, bn=down["bn"], act="relu")
    f_down = _fusion_recur(f_down, i + 1, fp)
    # relu(f + relu(DCN(upsample(f_down)))): both add/relus fused in the GEMM epilogue
    return dcn_layer(upsample2x_bilinear(f_down), up["dcn"], stride=1, padding=1,
                     act="relu", residual=f, res_mode="add_relu")


def fusion_module(a, b, fp):
    f = pallas_add(a, b)
    return _fusion_recur(f, 0, fp)


# --------------------------- VideoFeatureFusion2 ------------------------------

def offset_activation_function(x):
    # tiny post-process on a [B,2,h/2,w/2] tensor; kept in plain JAX
    return jnp.tan(jax.nn.sigmoid(x) * 3.14 - 1.57)


def video_feature_fusion2_forward(features, P, *, frames, repeat, conv_k):
    assert len(features) == frames
    bs, ch, h, w = features[0].shape
    # boundary: NCHW (PyTorch) -> NHWC (internal); everything below stays NHWC.
    feats_in = [jnp.transpose(f, (0, 2, 3, 1)) for f in features]
    feature_ori = feats_in[0]

    # conv_in on all frames with a single fused GEMM (batched along M)
    y_all = conv2d(jnp.concatenate(feats_in, axis=0), P["conv_in"]["w"], None,
                   stride=2, padding=1, bn=P["conv_in"]["bn"], act="relu")
    feats = list(jnp.split(y_all, frames, axis=0))

    ret_offset_parts = [None] * (frames - 1)
    ret_unc = [None] * (frames - 1)
    KK = conv_k * conv_k
    for r in range(repeat):
        last = (r == repeat - 1)
        for t in range(frames - 1):
            f_prev = feats[-t - 1]
            f_current = feats[-t - 2]
            f_add = fusion_module(f_current, f_prev, P["fusion"])

            om = conv2d(f_add, P["offmask"]["w1"], P["offmask"]["b1"],
                        stride=1, padding=3, act="relu")
            om = conv2d(om, P["offmask"]["w2"], P["offmask"]["b2"],
                        stride=1, padding=1)
            o1, o2, m = om[..., :KK], om[..., KK:2 * KK], om[..., 2 * KK:]
            offset = jnp.concatenate([o1, o2], axis=-1)
            mask = jax.nn.sigmoid(m)

            # alpha head (+ uncertainty head fused into the same GEMM on last repeat)
            if last:
                w_head = jnp.concatenate([P["alpha"]["w"], P["unc"]["w"]], axis=0)
                b_head = jnp.concatenate([P["alpha"]["b"], P["unc"]["b"]], axis=0)
                head = conv2d(f_add, w_head, b_head, stride=1, padding=1)
                alpha_logit = head[..., 0:1]
                unc = head[..., 1:2]
            else:
                alpha_logit = conv2d(f_add, P["alpha"]["w"], P["alpha"]["b"],
                                     stride=1, padding=1)
                unc = None

            # deformable alignment with the sigmoid-alpha blend fused in the epilogue
            f_out = dcn_v2(f_prev, offset, mask, P["dcn"]["w"], P["dcn"]["b"],
                           stride=P["dcn"]["stride"], padding=P["dcn"]["padding"],
                           dilation=P["dcn"]["dilation"],
                           blend=(alpha_logit, f_current))
            feats[-t - 2] = f_out
            if last:
                ret_offset_parts[-t - 1] = (o1, o2)
                ret_unc[-t - 1] = jnp.transpose(unc, (0, 3, 1, 2))

    ret_offset = []
    for pair in ret_offset_parts:
        if pair is None:
            ret_offset.append(None)
            continue
        po1, po2 = pair
        # == offset.view(bs, 2, KK, h/2, w/2).mean(2) under the concat(o1,o2) layout
        mo = jnp.stack([po1.mean(axis=-1), po2.mean(axis=-1)], axis=1)
        ret_offset.append(offset_activation_function(mo))

    y = conv_transpose2d(feats[0], P["conv_out"]["wt"], stride=2, padding=1,
                         bn=P["conv_out"]["bn1"])
    # relu(bn(conv(y))) + feature_ori, residual fused in the GEMM epilogue
    final = conv2d(y, P["conv_out"]["w3"], None, stride=1, padding=1,
                   bn=P["conv_out"]["bn2"], act="relu",
                   residual=feature_ori, res_mode="add")
    return jnp.transpose(final, (0, 3, 1, 2)), ret_offset, ret_unc


# ------------------------------- parameters -----------------------------------

def _bn(c):
    # eval-mode BatchNorm: (gamma, beta, running_mean, running_var, eps)
    return (jnp.ones((c,), jnp.float32), jnp.zeros((c,), jnp.float32),
            jnp.zeros((c,), jnp.float32), jnp.ones((c,), jnp.float32), 1e-5)


def init_params(key, channels_in, conv_config=(3, 1, 1, 1)):
    chi = channels_in * 2
    k, s, p, d = conv_config
    keys = iter(jax.random.split(key, 64))

    def wconv(cout, cin, kk, scale=0.05):
        return scale * jax.random.normal(next(keys), (cout, cin, kk, kk), jnp.float32)

    def bvec(c, scale=0.05):
        return scale * jax.random.normal(next(keys), (c,), jnp.float32)

    def dcn_params(cin, cout, kk):
        # internal offset/mask conv is zero-initialized like the reference DCN
        return {"off_w": jnp.zeros((3 * kk * kk, cin, kk, kk), jnp.float32),
                "off_b": jnp.zeros((3 * kk * kk,), jnp.float32),
                "w": wconv(cout, cin, kk),
                "b": bvec(cout)}

    fusion = {"n_level": 2, "down": [], "up": []}
    for i in range(2):
        ch1 = chi * 2 ** i
        ch2 = chi * 2 ** (i + 1)
        fusion["down"].append({"dcn": dcn_params(ch1, ch2, 4), "bn": _bn(ch2)})
        fusion["up"].append({"dcn": dcn_params(ch2, ch1, 3)})

    P = {
        "conv_in": {"w": wconv(chi, channels_in, 4), "bn": _bn(chi)},
        "conv_out": {"wt": 0.05 * jax.random.normal(next(keys),
                                                    (chi, channels_in, 4, 4), jnp.float32),
                     "bn1": _bn(channels_in),
                     "w3": wconv(channels_in, channels_in, 3),
                     "bn2": _bn(channels_in)},
        "alpha": {"w": jnp.zeros((1, chi, 3, 3), jnp.float32),   # zero-init per __init__
                  "b": jnp.zeros((1,), jnp.float32)},
        "offmask": {"w1": wconv(chi, chi, 7), "b1": bvec(chi),
                    "w2": wconv(k * k * 3, chi, 3), "b2": bvec(k * k * 3)},
        "unc": {"w": wconv(1, chi, 3), "b": bvec(1)},
        "dcn": {"w": wconv(chi, chi, k), "b": bvec(chi),
                "stride": s, "padding": p, "dilation": d},
        "fusion": fusion,
        # TODO(synk): conv_adp is defined in __init__ but never used by forward(); omitted.
    }
    return P


# --------------------------------- main ----------------------------------------

if __name__ == "__main__":
    key = jax.random.PRNGKey(0)
    kp, kf = jax.random.split(key)
    channels_in, frames, repeat = 4, 2, 1
    bs, h, w = 2, 16, 16

    P = init_params(kp, channels_in)
    fkeys = jax.random.split(kf, frames)
    features = [jax.random.normal(fkeys[i], (bs, channels_in, h, w), jnp.float32)
                for i in range(frames)]

    out, offsets, uncs = video_feature_fusion2_forward(
        features, P, frames=frames, repeat=repeat, conv_k=3)

    jax.block_until_ready(out)
    for o in offsets:
        if o is not None:
            jax.block_until_ready(o)
    for u in uncs:
        if u is not None:
            jax.block_until_ready(u)

    assert out.shape == (bs, channels_in, h, w)
    assert offsets[0].shape == (bs, 2, h // 2, w // 2)
    assert uncs[0].shape == (bs, 1, h // 2, w // 2)
    print("KERNEL_OK")
</pallas_src>

<mosaic_0001>
module attributes {stable_mosaic.version = 11 : i64} {
  func.func @_gemm_kernel(%arg0: i32, %arg1: i32, %arg2: memref<256x64xbf16, #tpu.memory_space<vmem>>, %arg3: memref<64x128xbf16, #tpu.memory_space<vmem>>, %arg4: memref<1x128xf32, #tpu.memory_space<vmem>>, %arg5: memref<1x128xf32, #tpu.memory_space<vmem>>, %arg6: memref<256x128xf32, #tpu.memory_space<vmem>>) attributes {dimension_semantics = [#tpu.dimension_semantics<parallel>, #tpu.dimension_semantics<parallel>], iteration_bounds = array<i64: 1, 1>, scalar_prefetch = 0 : i64, scratch_operands = 0 : i64, tpu.core_type = #tpu.core_type<tc>, window_params = [{transform_indices = @transform_0, window_bounds = array<i64: 256, 64>}, {transform_indices = @transform_1, window_bounds = array<i64: 64, 128>}, {transform_indices = @transform_2, window_bounds = array<i64: 1, 128>}, {transform_indices = @transform_3, window_bounds = array<i64: 1, 128>}, {transform_indices = @transform_4, window_bounds = array<i64: 256, 128>}]} {
    %c0 = arith.constant 0 : index
    %c0_0 = arith.constant 0 : index
    %0 = vector.load %arg2[%c0, %c0_0] : memref<256x64xbf16, #tpu.memory_space<vmem>>, vector<256x64xbf16>
    %c0_1 = arith.constant 0 : index
    %c0_2 = arith.constant 0 : index
    %1 = vector.load %arg3[%c0_1, %c0_2] : memref<64x128xbf16, #tpu.memory_space<vmem>>, vector<64x128xbf16>
    %cst = arith.constant dense<0.000000e+00> : vector<256x128xf32>
    %2 = tpu.matmul %0, %1, %cst {dimension_numbers = #tpu.dot_dimension_numbers<[1], [0], [0], [1], [0, 0, 1, 1], [], []>} : vector<256x64xbf16>, vector<64x128xbf16>, vector<256x128xf32> -> vector<256x128xf32>
    %c0_3 = arith.constant 0 : index
    %c0_4 = arith.constant 0 : index
    %3 = vector.load %arg4[%c0_3, %c0_4] : memref<1x128xf32, #tpu.memory_space<vmem>>, vector<1x128xf32>
    %4 = vector.broadcast %3 : vector<1x128xf32> to vector<256x128xf32>
    %5 = arith.mulf %2, %4 : vector<256x128xf32>
    %c0_5 = arith.constant 0 : index
    %c0_6 = arith.constant 0 : index
    %6 = vector.load %arg5[%c0_5, %c0_6] : memref<1x128xf32, #tpu.memory_space<vmem>>, vector<1x128xf32>
    %7 = vector.broadcast %6 : vector<1x128xf32> to vector<256x128xf32>
    %8 = arith.addf %5, %7 : vector<256x128xf32>
    %cst_7 = arith.constant 0.000000e+00 : f32
    %9 = vector.broadcast %cst_7 : f32 to vector<256x128xf32>
    %10 = arith.maximumf %8, %9 : vector<256x128xf32>
    %c0_8 = arith.constant 0 : index
    %c0_9 = arith.constant 0 : index
    %11 = vector.load %arg6[%c0_8, %c0_9] : memref<256x128xf32, #tpu.memory_space<vmem>>, vector<256x128xf32>
    tpu.vector_store %arg6[%c0_8, %c0_9], %10 {strides = array<i32>} : memref<256x128xf32, #tpu.memory_space<vmem>>, vector<256x128xf32>,
    return
  }
  func.func @transform_0(%arg0: i32, %arg1: i32) -> (i32, i32) {
    %c0_i32 = arith.constant 0 : i32
    %c0_i32_0 = arith.constant 0 : i32
    return %arg0, %c0_i32 : i32, i32
  }
  func.func @transform_1(%arg0: i32, %arg1: i32) -> (i32, i32) {
    %c0_i32 = arith.constant 0 : i32
    %c0_i32_0 = arith.constant 0 : i32
    return %c0_i32, %arg1 : i32, i32
  }
  func.func @transform_2(%arg0: i32, %arg1: i32) -> (i32, i32) {
    %c0_i32 = arith.constant 0 : i32
    %c0_i32_0 = arith.constant 0 : i32
    return %c0_i32, %arg1 : i32, i32
  }
  func.func @transform_3(%arg0: i32, %arg1: i32) -> (i32, i32) {
    %c0_i32 = arith.constant 0 : i32
    %c0_i32_0 = arith.constant 0 : i32
    return %c0_i32, %arg1 : i32, i32
  }
  func.func @transform_4(%arg0: i32, %arg1: i32) -> (i32, i32) {
    %c0_i32 = arith.constant 0 : i32
    return %arg0, %arg1 : i32, i32
  }
}

</mosaic_0001>

<llo_original>
// kernel: tpu_custom_call.1
$region0: #{tpu_custom_call.1}
  #allocation0 [shape = 'u32[]', space=smem, size = 0x4, offset = 0x4, fixed_abs, tag = 'smem constant byte address 0x4 - core index']
  #allocation1 [shape = 'u32[144,128]{1,0:T(1,128)}', space=vmem, size = 0x12000, scoped, tag = 'internal scratch']
  %s0 = inlined_call_operand.vmem [shape: bf16[256,64], index: 0, kind: input, shape index: {}]
  %s1 = inlined_call_operand.vmem [shape: bf16[64,128], index: 1, kind: input, shape index: {}]
  %s2 = inlined_call_operand.vmem [shape: f32[1,128], index: 2, kind: input, shape index: {}]
  %s3 = inlined_call_operand.vmem [shape: f32[1,128], index: 3, kind: input, shape index: {}]
  %s4 = inlined_call_operand.hbm [shape: f32[256,128], index: 4, kind: output, shape index: {}]
  %s5 = sld [smem:[#allocation0]]
  $region26: #{tpu_custom_call.1} parent=0
    _
  %s7 = ssub.s32 1, %s5
  %s8 = scalar_select 0, %s7, %s5
  $region1: #{tpu_custom_call.1} parent=0
    #allocation2 [shape = 'u8[131072]{0}', space=vmem, size = 0x20000, scoped, tag = 'output window, operand 0, single buffered']
    #allocation3 [shape = 's32[1]{0}', space=sflag, size = 0x4, scoped, tag = 'scoped memory for tpu_custom_call.1']
    %9 = vsyncpa [#allocation3], 0
    // Predicated region
    $region2: #{tpu_custom_call.1} parent=1 // pred_check
      _
    $region3: #{tpu_custom_call.1} parent=1 // pred_check_branch
      %11 = sbr.rel (0) target = $region5
    $region4: #{tpu_custom_call.1} parent=1 // pred_region
      _
    $region5: #{tpu_custom_call.1} parent=1 // pred_fallthru
      _
    // Predicated region
    $region6: #{tpu_custom_call.1} parent=1 // pred_check
      _
    $region7: #{tpu_custom_call.1} parent=1 // pred_check_branch
      %13 = sbr.rel (0) target = $region9
    $region8: #{tpu_custom_call.1} parent=1 // pred_region
      _
    $region9: #{tpu_custom_call.1} parent=1 // pred_fallthru
      _
    // Predicated region
    $region10: #{tpu_custom_call.1} parent=1 // pred_check
      _
    $region11: #{tpu_custom_call.1} parent=1 // pred_check_branch
      %15 = sbr.rel (0) target = $region13
    $region12: #{tpu_custom_call.1} parent=1 // pred_region
      _
    $region13: #{tpu_custom_call.1} parent=1 // pred_fallthru
      _
    // Predicated region
    $region14: #{tpu_custom_call.1} parent=1 // pred_check
      _
    $region15: #{tpu_custom_call.1} parent=1 // pred_check_branch
      %17 = sbr.rel (0) target = $region17
    $region16: #{tpu_custom_call.1} parent=1 // pred_region
      _
    $region17: #{tpu_custom_call.1} parent=1 // pred_fallthru
      _
    %v19 = vld [vmem:[%s0] sm:$0xf]
    %v20 = vld [vmem:[%s0 + $0x4] sm:$0xf]
    %v21 = vld [vmem:[%s0 + $0x8] sm:$0xf]
    %v22 = vld [vmem:[%s0 + $0xc] sm:$0xf]
    %v23 = vld [vmem:[%s0 + $0x10] sm:$0xf]
    %v24 = vld [vmem:[%s0 + $0x14] sm:$0xf]
    %v25 = vld [vmem:[%s0 + $0x18] sm:$0xf]
    %v26 = vld [vmem:[%s0 + $0x1c] sm:$0xf]
    %v27 = vld [vmem:[%s0 + $0x20] sm:$0xf]
    %v28 = vld [vmem:[%s0 + $0x24] sm:$0xf]
    %v29 = vld [vmem:[%s0 + $0x28] sm:$0xf]
    %v30 = vld [vmem:[%s0 + $0x2c] sm:$0xf]
    %v31 = vld [vmem:[%s0 + $0x30] sm:$0xf]
    %v32 = vld [vmem:[%s0 + $0x34] sm:$0xf]
    %v33 = vld [vmem:[%s0 + $0x38] sm:$0xf]
    %v34 = vld [vmem:[%s0 + $0x3c] sm:$0xf]
    %v35 = vld [vmem:[%s0 + $0x40] sm:$0xf]
    %v36 = vld [vmem:[%s0 + $0x44] sm:$0xf]
    %v37 = vld [vmem:[%s0 + $0x48] sm:$0xf]
    %v38 = vld [vmem:[%s0 + $0x4c] sm:$0xf]
    %v39 = vld [vmem:[%s0 + $0x50] sm:$0xf]
    %v40 = vld [vmem:[%s0 + $0x54] sm:$0xf]
    %v41 = vld [vmem:[%s0 + $0x58] sm:$0xf]
    %v42 = vld [vmem:[%s0 + $0x5c] sm:$0xf]
    %v43 = vld [vmem:[%s0 + $0x60] sm:$0xf]
    %v44 = vld [vmem:[%s0 + $0x64] sm:$0xf]
    %v45 = vld [vmem:[%s0 + $0x68] sm:$0xf]
    %v46 = vld [vmem:[%s0 + $0x6c] sm:$0xf]
    %v47 = vld [vmem:[%s0 + $0x70] sm:$0xf]
    %v48 = vld [vmem:[%s0 + $0x74] sm:$0xf]
    %v49 = vld [vmem:[%s0 + $0x78] sm:$0xf]
    %v50 = vld [vmem:[%s0 + $0x7c] sm:$0xf]
    %v51 = vld [vmem:[%s1] sm:$0xf]
    %v52 = vld [vmem:[%s1 + $0x4] sm:$0xf]
    %v53 = vld [vmem:[%s1 + $0x8] sm:$0xf]
    %v54 = vld [vmem:[%s1 + $0xc] sm:$0xf]
    %v55 = vld [vmem:[%s1 + $0x10] sm:$0xf]
    %v56 = vld [vmem:[%s1 + $0x14] sm:$0xf]
    %v57 = vld [vmem:[%s1 + $0x18] sm:$0xf]
    %v58 = vld [vmem:[%s1 + $0x1c] sm:$0xf]
    %v91 = vunpack.c.l.b16 %v19
    %v92 = vunpack.c.l.b16 %v20
    %v93 = vunpack.c.l.b16 %v21
    %v94 = vunpack.c.l.b16 %v22
    %v95 = vunpack.c.l.b16 %v23
    %v96 = vunpack.c.l.b16 %v24
    %v97 = vunpack.c.l.b16 %v25
    %v98 = vunpack.c.l.b16 %v26
    %v99 = vunpack.c.l.b16 %v27
    %v100 = vunpack.c.l.b16 %v28
    %v101 = vunpack.c.l.b16 %v29
    %v102 = vunpack.c.l.b16 %v30
    %v103 = vunpack.c.l.b16 %v31
    %v104 = vunpack.c.l.b16 %v32
    %v105 = vunpack.c.l.b16 %v33
    %v106 = vunpack.c.l.b16 %v34
    %v107 = vunpack.c.l.b16 %v35
    %v108 = vunpack.c.l.b16 %v36
    %v109 = vunpack.c.l.b16 %v37
    %v110 = vunpack.c.l.b16 %v38
    %v111 = vunpack.c.l.b16 %v39
    %v112 = vunpack.c.l.b16 %v40
    %v113 = vunpack.c.l.b16 %v41
    %v114 = vunpack.c.l.b16 %v42
    %v115 = vunpack.c.l.b16 %v43
    %v116 = vunpack.c.l.b16 %v44
    %v117 = vunpack.c.l.b16 %v45
    %v118 = vunpack.c.l.b16 %v46
    %v119 = vunpack.c.l.b16 %v47
    %v120 = vunpack.c.l.b16 %v48
    %v121 = vunpack.c.l.b16 %v49
    %v122 = vunpack.c.l.b16 %v50
    %v123 = vpack.c.b16 %v92, %v91
    %v124 = vpack.c.b16 %v94, %v93
    %v125 = vpack.c.b16 %v96, %v95
    %v126 = vpack.c.b16 %v98, %v97
    %v127 = vpack.c.b16 %v100, %v99
    %v128 = vpack.c.b16 %v102, %v101
    %v129 = vpack.c.b16 %v104, %v103
    %v130 = vpack.c.b16 %v106, %v105
    %v131 = vpack.c.b16 %v108, %v107
    %v132 = vpack.c.b16 %v110, %v109
    %v133 = vpack.c.b16 %v112, %v111
    %v134 = vpack.c.b16 %v114, %v113
    %v135 = vpack.c.b16 %v116, %v115
    %v136 = vpack.c.b16 %v118, %v117
    %v137 = vpack.c.b16 %v120, %v119
    %v138 = vpack.c.b16 %v122, %v121
    %v147 = vunpack.c.l.b16 %v51
    %v148 = vunpack.c.l.b16 %v52
    %v149 = vunpack.c.l.b16 %v53
    %v150 = vunpack.c.l.b16 %v54
    %v151 = vunpack.c.l.b16 %v55
    %v152 = vunpack.c.l.b16 %v56
    %v153 = vunpack.c.l.b16 %v57
    %v154 = vunpack.c.l.b16 %v58
    %v155 = vpack.c.b16 %v148, %v147
    %v156 = vpack.c.b16 %v150, %v149
    %v157 = vpack.c.b16 %v152, %v151
    %v158 = vpack.c.b16 %v154, %v153
    %vm163 = vcmask 523264
    %v165 = vsel %vm163, %v123, 0
    %v168 = vsel %vm163, %v124, 0
    %v171 = vsel %vm163, %v125, 0
    %v174 = vsel %vm163, %v126, 0
    %v177 = vsel %vm163, %v127, 0
    %v180 = vsel %vm163, %v128, 0
    %v183 = vsel %vm163, %v129, 0
    %v186 = vsel %vm163, %v130, 0
    %v189 = vsel %vm163, %v131, 0
    %v192 = vsel %vm163, %v132, 0
    %v195 = vsel %vm163, %v133, 0
    %v198 = vsel %vm163, %v134, 0
    %v201 = vsel %vm163, %v135, 0
    %v204 = vsel %vm163, %v136, 0
    %v207 = vsel %vm163, %v137, 0
    %v210 = vsel %vm163, %v138, 0
    %212 = vmatprep.subr.bf16.mxu0 0
    %213 = vmatpush1.bf16.msra.mxu0 %v155
    %214 = vmatprep.subr.bf16.mxu0 0
    %215 = vmatpush1.bf16.msra.mxu0 %v156
    %216 = vmatprep.subr.bf16.mxu0 0
    %217 = vmatpush1.bf16.msra.mxu0 %v157
    %218 = vmatprep.subr.bf16.mxu0 0
    %219 = vmatpush1.bf16.msra.mxu0 %v158
    %220 = vmatprep.subr.bf16.mxu0 0
    %221 = vmatpush1.bf16.msra.mxu0 0
    %222 = vmatprep.subr.bf16.mxu0 0
    %223 = vmatpush1.bf16.msra.mxu0 0
    %224 = vmatprep.subr.bf16.mxu0 0
    %225 = vmatpush1.bf16.msra.mxu0 0
    %226 = vmatprep.subr.bf16.mxu0 0
    %227 = vmatpush1.bf16.msra.mxu0 0
    %228 = vmatprep.subr.bf16.mxu0 0
    %229 = vmatpush1.bf16.msra.mxu0 0
    %230 = vmatprep.subr.bf16.mxu0 0
    %231 = vmatpush1.bf16.msra.mxu0 0
    %232 = vmatprep.subr.bf16.mxu0 0
    %233 = vmatpush1.bf16.msra.mxu0 0
    %234 = vmatprep.subr.bf16.mxu0 0
    %235 = vmatpush1.bf16.msra.mxu0 0
    %236 = vmatprep.subr.bf16.mxu0 0
    %237 = vmatpush1.bf16.msra.mxu0 0
    %238 = vmatprep.subr.bf16.mxu0 0
    %239 = vmatpush1.bf16.msra.mxu0 0
    %240 = vmatprep.subr.bf16.mxu0 0
    %241 = vmatpush1.bf16.msra.mxu0 0
    %242 = vmatprep.subr.bf16.mxu0 0
    %243 = vmatpush1.bf16.msra.mxu0 0
    %244 = vmatprep.mubr.bf16.mxu0 0
    %245 = vmatmul.mubr.bf16.gmra.mrb[0].mxu0 %v165
    %v246 = vpop.f32.mrb[0].mxu0
    %v247 = vadd.f32 0.0, %v246
    %v248 = vpop.f32.mrb[0].mxu0
    %v249 = vpop.f32.mrb[0].mxu0
    %v250 = vadd.f32 0.0, %v249
    %v251 = vpop.f32.mrb[0].mxu0
    %252 = vmatprep.mubr.bf16.mxu0 0
    %253 = vmatmul.mubr.bf16.gmra.mrb[0].mxu0 %v168
    %v254 = vpop.f32.mrb[0].mxu0
    %v255 = vadd.f32 0.0, %v254
    %v256 = vpop.f32.mrb[0].mxu0
    %v257 = vpop.f32.mrb[0].mxu0
    %v258 = vadd.f32 0.0, %v257
    %v259 = vpop.f32.mrb[0].mxu0
    %260 = vmatprep.mubr.bf16.mxu0 0
    %261 = vmatmul.mubr.bf16.gmra.mrb[0].mxu0 %v171
    %v262 = vpop.f32.mrb[0].mxu0
    %v263 = vadd.f32 0.0, %v262
    %v264 = vpop.f32.mrb[0].mxu0
    %v265 = vpop.f32.mrb[0].mxu0
    %v266 = vadd.f32 0.0, %v265
    %v267 = vpop.f32.mrb[0].mxu0
    %268 = vmatprep.mubr.bf16.mxu0 0
    %269 = vmatmul.mubr.bf16.gmra.mrb[0].mxu0 %v174
    %v270 = vpop.f32.mrb[0].mxu0
    %v271 = vadd.f32 0.0, %v270
    %v272 = vpop.f32.mrb[0].mxu0
    %v273 = vpop.f32.mrb[0].mxu0
    %v274 = vadd.f32 0.0, %v273
    %v275 = vpop.f32.mrb[0].mxu0
    %276 = vmatprep.mubr.bf16.mxu0 0
    %277 = vmatmul.mubr.bf16.gmra.mrb[0].mxu0 %v177
    %v278 = vpop.f32.mrb[0].mxu0
    %v279 = vadd.f32 0.0, %v278
    %v280 = vpop.f32.mrb[0].mxu0
    %v281 = vpop.f32.mrb[0].mxu0
    %v282 = vadd.f32 0.0, %v281
    %v283 = vpop.f32.mrb[0].mxu0
    %284 = vmatprep.mubr.bf16.mxu0 0
    %285 = vmatmul.mubr.bf16.gmra.mrb[0].mxu0 %v180
    %v286 = vpop.f32.mrb[0].mxu0
    %v287 = vadd.f32 0.0, %v286
    %v288 = vpop.f32.mrb[0].mxu0
    %v289 = vpop.f32.mrb[0].mxu0
    %v290 = vadd.f32 0.0, %v289
    %v291 = vpop.f32.mrb[0].mxu0
    %292 = vmatprep.mubr.bf16.mxu0 0
    %293 = vmatmul.mubr.bf16.gmra.mrb[0].mxu0 %v183
    %v294 = vpop.f32.mrb[0].mxu0
    %v295 = vadd.f32 0.0, %v294
    %v296 = vpop.f32.mrb[0].mxu0
    %v297 = vpop.f32.mrb[0].mxu0
    %v298 = vadd.f32 0.0, %v297
    %v299 = vpop.f32.mrb[0].mxu0
    %300 = vmatprep.mubr.bf16.mxu0 0
    %301 = vmatmul.mubr.bf16.gmra.mrb[0].mxu0 %v186
    %v302 = vpop.f32.mrb[0].mxu0
    %v303 = vadd.f32 0.0, %v302
    %v304 = vpop.f32.mrb[0].mxu0
    %v305 = vpop.f32.mrb[0].mxu0
    %v306 = vadd.f32 0.0, %v305
    %v307 = vpop.f32.mrb[0].mxu0
    %308 = vmatprep.mubr.bf16.mxu0 0
    %309 = vmatmul.mubr.bf16.gmra.mrb[0].mxu0 %v189
    %v310 = vpop.f32.mrb[0].mxu0
    %v311 = vadd.f32 0.0, %v310
    %v312 = vpop.f32.mrb[0].mxu0
    %v313 = vpop.f32.mrb[0].mxu0
    %v314 = vadd.f32 0.0, %v313
    %v315 = vpop.f32.mrb[0].mxu0
    %316 = vmatprep.mubr.bf16.mxu0 0
    %317 = vmatmul.mubr.bf16.gmra.mrb[0].mxu0 %v192
    %v318 = vpop.f32.mrb[0].mxu0
    %v319 = vadd.f32 0.0, %v318
    %v320 = vpop.f32.mrb[0].mxu0
    %v321 = vpop.f32.mrb[0].mxu0
    %v322 = vadd.f32 0.0, %v321
    %v323 = vpop.f32.mrb[0].mxu0
    %324 = vmatprep.mubr.bf16.mxu0 0
    %325 = vmatmul.mubr.bf16.gmra.mrb[0].mxu0 %v195
    %v326 = vpop.f32.mrb[0].mxu0
    %v327 = vadd.f32 0.0, %v326
    %v328 = vpop.f32.mrb[0].mxu0
    %v329 = vpop.f32.mrb[0].mxu0
    %v330 = vadd.f32 0.0, %v329
    %v331 = vpop.f32.mrb[0].mxu0
    %332 = vmatprep.mubr.bf16.mxu0 0
    %333 = vmatmul.mubr.bf16.gmra.mrb[0].mxu0 %v198
    %v334 = vpop.f32.mrb[0].mxu0
    %v335 = vadd.f32 0.0, %v334
    %v336 = vpop.f32.mrb[0].mxu0
    %v337 = vpop.f32.mrb[0].mxu0
    %v338 = vadd.f32 0.0, %v337
    %v339 = vpop.f32.mrb[0].mxu0
    %340 = vmatprep.mubr.bf16.mxu0 0
    %341 = vmatmul.mubr.bf16.gmra.mrb[0].mxu0 %v201
    %v342 = vpop.f32.mrb[0].mxu0
    %v343 = vadd.f32 0.0, %v342
    %v344 = vpop.f32.mrb[0].mxu0
    %v345 = vpop.f32.mrb[0].mxu0
    %v346 = vadd.f32 0.0, %v345
    %v347 = vpop.f32.mrb[0].mxu0
    %348 = vmatprep.mubr.bf16.mxu0 0
    %349 = vmatmul.mubr.bf16.gmra.mrb[0].mxu0 %v204
    %v350 = vpop.f32.mrb[0].mxu0
    %v351 = vadd.f32 0.0, %v350
    %v352 = vpop.f32.mrb[0].mxu0
    %v353 = vpop.f32.mrb[0].mxu0
    %v354 = vadd.f32 0.0, %v353
    %v355 = vpop.f32.mrb[0].mxu0
    %356 = vmatprep.mubr.bf16.mxu0 0
    %357 = vmatmul.mubr.bf16.gmra.mrb[0].mxu0 %v207
    %v358 = vpop.f32.mrb[0].mxu0
    %v359 = vadd.f32 0.0, %v358
    %v360 = vpop.f32.mrb[0].mxu0
    %v361 = vpop.f32.mrb[0].mxu0
    %v362 = vadd.f32 0.0, %v361
    %v363 = vpop.f32.mrb[0].mxu0
    %364 = vmatprep.mubr.bf16.mxu0 0
    %365 = vmatmul.mubr.bf16.gmra.mrb[0].mxu0 %v210
    %v366 = vpop.f32.mrb[0].mxu0
    %v367 = vadd.f32 0.0, %v366
    %v368 = vpop.f32.mrb[0].mxu0
    %v369 = vpop.f32.mrb[0].mxu0
    %v370 = vadd.f32 0.0, %v369
    %v371 = vpop.f32.mrb[0].mxu0
    %372 = vdwg.mxu0
    %v373 = vld [vmem:[%s2] sm:$0x1]
    %v375 = vlaneseq
    %v376 = vshrl.u32 %v375, 7
    %v377 = vsub.s32 0, %v376
    %v378 = vrot.slane %v373, %v377
    %v380 = vmul.f32 %v247, %v378
    %v381 = vmul.f32 %v250, %v378
    %v382 = vmul.f32 %v255, %v378
    %v383 = vmul.f32 %v258, %v378
    %v384 = vmul.f32 %v263, %v378
    %v385 = vmul.f32 %v266, %v378
    %v386 = vmul.f32 %v271, %v378
    %v387 = vmul.f32 %v274, %v378
    %v388 = vmul.f32 %v279, %v378
    %v389 = vmul.f32 %v282, %v378
    %v390 = vmul.f32 %v287, %v378
    %v391 = vmul.f32 %v290, %v378
    %v392 = vmul.f32 %v295, %v378
    %v393 = vmul.f32 %v298, %v378
    %v394 = vmul.f32 %v303, %v378
    %v395 = vmul.f32 %v306, %v378
    %v396 = vmul.f32 %v311, %v378
    %v397 = vmul.f32 %v314, %v378
    %v398 = vmul.f32 %v319, %v378
    %v399 = vmul.f32 %v322, %v378
    %v400 = vmul.f32 %v327, %v378
    %v401 = vmul.f32 %v330, %v378
    %v402 = vmul.f32 %v335, %v378
    %v403 = vmul.f32 %v338, %v378
    %v404 = vmul.f32 %v343, %v378
    %v405 = vmul.f32 %v346, %v378
    %v406 = vmul.f32 %v351, %v378
    %v407 = vmul.f32 %v354, %v378
    %v408 = vmul.f32 %v359, %v378
    %v409 = vmul.f32 %v362, %v378
    %v410 = vmul.f32 %v367, %v378
    %v411 = vmul.f32 %v370, %v378
    %v412 = vld [vmem:[%s3] sm:$0x1]
    %v414 = vlaneseq
    %v415 = vshrl.u32 %v414, 7
    %v416 = vsub.s32 0, %v415
    %v417 = vrot.slane %v412, %v416
    %v419 = vadd.f32 %v380, %v417
    %v420 = vadd.f32 %v381, %v417
    %v421 = vadd.f32 %v382, %v417
    %v422 = vadd.f32 %v383, %v417
    %v423 = vadd.f32 %v384, %v417
    %v424 = vadd.f32 %v385, %v417
    %v425 = vadd.f32 %v386, %v417
    %v426 = vadd.f32 %v387, %v417
    %v427 = vadd.f32 %v388, %v417
    %v428 = vadd.f32 %v389, %v417
    %v429 = vadd.f32 %v390, %v417
    %v430 = vadd.f32 %v391, %v417
    %v431 = vadd.f32 %v392, %v417
    %v432 = vadd.f32 %v393, %v417
    %v433 = vadd.f32 %v394, %v417
    %v434 = vadd.f32 %v395, %v417
    %v435 = vadd.f32 %v396, %v417
    %v436 = vadd.f32 %v397, %v417
    %v437 = vadd.f32 %v398, %v417
    %v438 = vadd.f32 %v399, %v417
    %v439 = vadd.f32 %v400, %v417
    %v440 = vadd.f32 %v401, %v417
    %v441 = vadd.f32 %v402, %v417
    %v442 = vadd.f32 %v403, %v417
    %v443 = vadd.f32 %v404, %v417
    %v444 = vadd.f32 %v405, %v417
    %v445 = vadd.f32 %v406, %v417
    %v446 = vadd.f32 %v407, %v417
    %v447 = vadd.f32 %v408, %v417
    %v448 = vadd.f32 %v409, %v417
    %v449 = vadd.f32 %v410, %v417
    %v450 = vadd.f32 %v411, %v417
    %v451 = vmax.f32 %v419, 0.0
    %v452 = vmax.f32 %v420, 0.0
    %v453 = vmax.f32 %v421, 0.0
    %v454 = vmax.f32 %v422, 0.0
    %v455 = vmax.f32 %v423, 0.0
    %v456 = vmax.f32 %v424, 0.0
    %v457 = vmax.f32 %v425, 0.0
    %v458 = vmax.f32 %v426, 0.0
    %v459 = vmax.f32 %v427, 0.0
    %v460 = vmax.f32 %v428, 0.0
    %v461 = vmax.f32 %v429, 0.0
    %v462 = vmax.f32 %v430, 0.0
    %v463 = vmax.f32 %v431, 0.0
    %v464 = vmax.f32 %v432, 0.0
    %v465 = vmax.f32 %v433, 0.0
    %v466 = vmax.f32 %v434, 0.0
    %v467 = vmax.f32 %v435, 0.0
    %v468 = vmax.f32 %v436, 0.0
    %v469 = vmax.f32 %v437, 0.0
    %v470 = vmax.f32 %v438, 0.0
    %v471 = vmax.f32 %v439, 0.0
    %v472 = vmax.f32 %v440, 0.0
    %v473 = vmax.f32 %v441, 0.0
    %v474 = vmax.f32 %v442, 0.0
    %v475 = vmax.f32 %v443, 0.0
    %v476 = vmax.f32 %v444, 0.0
    %v477 = vmax.f32 %v445, 0.0
    %v478 = vmax.f32 %v446, 0.0
    %v479 = vmax.f32 %v447, 0.0
    %v480 = vmax.f32 %v448, 0.0
    %v481 = vmax.f32 %v449, 0.0
    %v482 = vmax.f32 %v450, 0.0
    %483 = vst [vmem:[#allocation2] sm:$0xff] %v451
    %484 = vst [vmem:[#allocation2 + $0x8] sm:$0xff] %v452
    %485 = vst [vmem:[#allocation2 + $0x10] sm:$0xff] %v453
    %486 = vst [vmem:[#allocation2 + $0x18] sm:$0xff] %v454
    %487 = vst [vmem:[#allocation2 + $0x20] sm:$0xff] %v455
    %488 = vst [vmem:[#allocation2 + $0x28] sm:$0xff] %v456
    %489 = vst [vmem:[#allocation2 + $0x30] sm:$0xff] %v457
    %490 = vst [vmem:[#allocation2 + $0x38] sm:$0xff] %v458
    %491 = vst [vmem:[#allocation2 + $0x40] sm:$0xff] %v459
    %492 = vst [vmem:[#allocation2 + $0x48] sm:$0xff] %v460
    %493 = vst [vmem:[#allocation2 + $0x50] sm:$0xff] %v461
    %494 = vst [vmem:[#allocation2 + $0x58] sm:$0xff] %v462
    %495 = vst [vmem:[#allocation2 + $0x60] sm:$0xff] %v463
    %496 = vst [vmem:[#allocation2 + $0x68] sm:$0xff] %v464
    %497 = vst [vmem:[#allocation2 + $0x70] sm:$0xff] %v465
    %498 = vst [vmem:[#allocation2 + $0x78] sm:$0xff] %v466
    %499 = vst [vmem:[#allocation2 + $0x80] sm:$0xff] %v467
    %500 = vst [vmem:[#allocation2 + $0x88] sm:$0xff] %v468
    %501 = vst [vmem:[#allocation2 + $0x90] sm:$0xff] %v469
    %502 = vst [vmem:[#allocation2 + $0x98] sm:$0xff] %v470
    %503 = vst [vmem:[#allocation2 + $0xa0] sm:$0xff] %v471
    %504 = vst [vmem:[#allocation2 + $0xa8] sm:$0xff] %v472
    %505 = vst [vmem:[#allocation2 + $0xb0] sm:$0xff] %v473
    %506 = vst [vmem:[#allocation2 + $0xb8] sm:$0xff] %v474
    %507 = vst [vmem:[#allocation2 + $0xc0] sm:$0xff] %v475
    %508 = vst [vmem:[#allocation2 + $0xc8] sm:$0xff] %v476
    %509 = vst [vmem:[#allocation2 + $0xd0] sm:$0xff] %v477
    %510 = vst [vmem:[#allocation2 + $0xd8] sm:$0xff] %v478
    %511 = vst [vmem:[#allocation2 + $0xe0] sm:$0xff] %v479
    %512 = vst [vmem:[#allocation2 + $0xe8] sm:$0xff] %v480
    %513 = vst [vmem:[#allocation2 + $0xf0] sm:$0xff] %v481
    %514 = vst [vmem:[#allocation2 + $0xf8] sm:$0xff] %v482
    // Predicated region
    $region18: #{tpu_custom_call.1} parent=1 // pred_check
      _
    $region19: #{tpu_custom_call.1} parent=1 // pred_check_branch
      %516 = sbr.rel (0) target = $region21
    $region20: #{tpu_custom_call.1} parent=1 // pred_region
      %s518 = ssub.s32 4096, 4096
      %519 = vsyncadd [#allocation3], %s518
      %s520 = sshll.u32 [#allocation2], 4
      %s521 = int_to_ptr.vmem [resolvable:$true] %s520
      %526 = dma.vmem_to_hbm [thread:$0]  %s521, 4096, %s4, [#allocation3], 128, 128, 8
    $region21: #{tpu_custom_call.1} parent=1 // pred_fallthru
      _
    // Predicated region
    $region22: #{tpu_custom_call.1} parent=1 // pred_check
      _
    $region23: #{tpu_custom_call.1} parent=1 // pred_check_branch
      %528 = sbr.rel (0) target = $region25
    $region24: #{tpu_custom_call.1} parent=1 // pred_region
      %529 = dma.done [#allocation3], 4096
    $region25: #{tpu_custom_call.1} parent=1 // pred_fallthru
      _
    %530 = vsyncpa [#allocation3], 1

</llo_original>
